<compile_context>
chip_gen: v6e
topology: v6e:2x2x1
jax: 0.10.0
libtpu: 0.0.40
codegen_flags: <defaults>
</compile_context>

<pallas_src>
import jax
import jax.numpy as jnp
from jax.experimental import pallas as pl
from jax.experimental.pallas import tpu as pltpu

LN_EPS = 1e-5


def _round_up(n, m):
    return ((n + m - 1) // m) * m


def _vmem_capacity_bytes():
    """Per-TensorCore VMEM capacity; conservative fallback if unavailable."""
    try:
        info = pltpu.get_tpu_info()
        cap = getattr(info, "vmem_capacity_bytes", None)
        if cap:
            return int(cap)
    except Exception:
        pass
    return 64 * 1024 * 1024          # v7x per-TC VMEM (smallest of the family)


def _layernorm_cols(h, gamma, beta):
    """LayerNorm over features = axis 0 (sublanes) in batch-on-lanes layout.
    Two-pass centered variance, matching torch.nn.LayerNorm."""
    mean = jnp.mean(h, axis=0, keepdims=True)
    c = h - mean
    var = jnp.mean(c * c, axis=0, keepdims=True)
    return c * jax.lax.rsqrt(var + LN_EPS) * gamma + beta


def dgltn_kernel(xT_ref, yT_ref,
                 w1a_ref, w1b_ref, p1_ref,
                 w2_ref, p2_ref,
                 w3_ref, b3_ref,
                 o_ref):
    # p*_ref columns: [bias | gamma | beta], kept f32.
    # All activations are (features, tile_b): features on sublanes, batch on
    # lanes -> fully lane-dense VALU/EUP work and unmasked output stores.
    p1 = p1_ref[...]
    p2 = p2_ref[...]
    cd = w2_ref.dtype            # matmul operand dtype (f32 or bf16); acc f32.

    # --- MLPBlock(2*nb_iprs -> H): concat-matmul split as w1a@xT + w1b@yT ---
    h = (jnp.dot(w1a_ref[...], xT_ref[...], preferred_element_type=jnp.float32)
         + jnp.dot(w1b_ref[...], yT_ref[...], preferred_element_type=jnp.float32)
         + p1[:, 0:1])
    h = jnp.maximum(h, 0.0)
    h = _layernorm_cols(h, p1[:, 1:2], p1[:, 2:3])             # (H, tb) f32

    # --- Residual(MLPBlock(H -> H)) ---
    r = jnp.dot(w2_ref[...], h.astype(cd),
                preferred_element_type=jnp.float32) + p2[:, 0:1]
    r = jnp.maximum(r, 0.0)
    r = _layernorm_cols(r, p2[:, 1:2], p2[:, 2:3])
    h = h + r                                                   # (H, tb)

    # --- final Linear(H -> nb_rels) + sigmoid ---
    logits = jnp.dot(w3_ref[...], h.astype(cd),
                     preferred_element_type=jnp.float32) + b3_ref[...]
    o_ref[...] = jax.nn.sigmoid(logits).astype(o_ref.dtype)     # (nb_rels, tb)


def dgltn_relation_forward(x_features, y_features, params, *, tile_b=8192):
    """x_features/y_features: (B, nb_iprs). Returns (B, nb_rels) float32."""
    B, nb_iprs = x_features.shape
    H = params["w2"].shape[0]
    nb_rels = params["w3"].shape[0]
    in_elt = x_features.dtype.itemsize

    # --- generation-aware VMEM budget + batch-tile sizing (lane multiples) ---
    vmem_cap = _vmem_capacity_bytes()
    vmem_limit = int(min(vmem_cap * 3 // 4, 96 * 1024 * 1024))   # ~48 MiB v7x, 96 MiB v5e/v6e
    # double-buffered x/y/out streams + a few f32 (H, tb) intermediates
    per_col = 2 * (2 * nb_iprs * in_elt + nb_rels * 4) + 8 * H * 4
    tb_cap = max(128, (vmem_limit // 3 // per_col) // 128 * 128)

    Bp0 = _round_up(B, 128)                  # batch is the lane (last) dim now
    tb = min(_round_up(min(tile_b, Bp0), 128), tb_cap)
    # Megacore (v7x): ensure >= 2 grid steps when the batch allows it so
    # dimension_semantics=("parallel",) shards work across both TensorCores.
    if Bp0 >= 2 * 128 and tb >= Bp0:
        tb = _round_up(pl.cdiv(Bp0, 2), 128)
    grid_b = pl.cdiv(Bp0, tb)
    Bp = grid_b * tb

    # Batch-on-lanes layout: single transpose copy in the wrapper (the pad for
    # the ragged last tile fuses into the same XLA copy).
    xT = jnp.transpose(x_features)
    yT = jnp.transpose(y_features)
    if Bp != B:
        pad = ((0, 0), (0, Bp - B))
        xT = jnp.pad(xT, pad)
        yT = jnp.pad(yT, pad)

    const = lambda i: (0, 0)                 # weights fetched once, VMEM-resident
    in_specs = [
        pl.BlockSpec((nb_iprs, tb), lambda i: (0, i)),   # xT tile (pipelined)
        pl.BlockSpec((nb_iprs, tb), lambda i: (0, i)),   # yT tile (pipelined)
        pl.BlockSpec((H, nb_iprs), const),               # w1a  (H, nb_iprs)
        pl.BlockSpec((H, nb_iprs), const),               # w1b
        pl.BlockSpec((H, 3), const),                     # [b1 | g1 | be1]
        pl.BlockSpec((H, H), const),                     # w2
        pl.BlockSpec((H, 3), const),                     # [b2 | g2 | be2]
        pl.BlockSpec((nb_rels, H), const),               # w3
        pl.BlockSpec((nb_rels, 1), const),               # b3
    ]
    out_spec = pl.BlockSpec((nb_rels, tb), lambda i: (0, i))

    wbytes = sum(int(params[k].size) * int(params[k].dtype.itemsize)
                 for k in ("w1a", "w1b", "p1", "w2", "p2", "w3", "b3"))
    cost = pl.CostEstimate(
        flops=2 * Bp * (2 * nb_iprs * H + H * H + H * nb_rels),
        transcendentals=Bp * (nb_rels + 2),           # sigmoid exps + 2 LN rsqrt/row
        bytes_accessed=Bp * (2 * nb_iprs * in_elt + nb_rels * 4) + wbytes,
    )

    outT = pl.pallas_call(
        dgltn_kernel,
        out_shape=jax.ShapeDtypeStruct((nb_rels, Bp), jnp.float32),
        grid=(grid_b,),
        in_specs=in_specs,
        out_specs=out_spec,
        compiler_params=pltpu.CompilerParams(
            dimension_semantics=("parallel",),        # megacore-shard batch (v7x)
            vmem_limit_bytes=vmem_limit,
        ),
        cost_estimate=cost,
    )(xT, yT,
      params["w1a"], params["w1b"], params["p1"],
      params["w2"], params["p2"],
      params["w3"], params["b3"])

    # cheap wrapper-side un-transpose + ragged-tail slice
    return jnp.transpose(outT[:, :B])


def init_params(key, nb_iprs, hidden, nb_rels):
    """Synthetic init matching nn.Linear defaults; weights kept in PyTorch
    (out, in) orientation so the transposed-layout kernel uses them directly.
    Per-layer (bias, gamma, beta) packed into a single (H, 3) array."""
    ks = jax.random.split(key, 6)
    d_in = 2 * nb_iprs

    def lin(kw, kb, fan_in, fan_out):
        bound = 1.0 / jnp.sqrt(fan_in)
        w = jax.random.uniform(kw, (fan_out, fan_in), jnp.float32, -bound, bound)
        b = jax.random.uniform(kb, (fan_out,), jnp.float32, -bound, bound)
        return w, b

    w1, b1 = lin(ks[0], ks[1], d_in, hidden)          # (H, 2*nb_iprs)
    w2, b2 = lin(ks[2], ks[3], hidden, hidden)        # (H, H)
    w3, b3 = lin(ks[4], ks[5], hidden, nb_rels)       # (nb_rels, H)
    ones = jnp.ones((hidden,), jnp.float32)
    zeros = jnp.zeros((hidden,), jnp.float32)
    return dict(
        w1a=w1[:, :nb_iprs], w1b=w1[:, nb_iprs:],
        p1=jnp.stack([b1, ones, zeros], axis=1),      # (H, 3)
        w2=w2,
        p2=jnp.stack([b2, ones, zeros], axis=1),      # (H, 3)
        w3=w3,
        b3=b3[:, None],                               # (nb_rels, 1)
    )


def cast_matmul_params(params, dtype):
    """bf16 path: only matmul operands get the narrow dtype; LN/bias stay f32."""
    q = dict(params)
    for k in ("w1a", "w1b", "w2", "w3"):
        q[k] = params[k].astype(dtype)
    return q


def _layernorm_rows(h, gamma, beta):
    mean = jnp.mean(h, axis=-1, keepdims=True)
    c = h - mean
    var = jnp.mean(c * c, axis=-1, keepdims=True)
    return c * jax.lax.rsqrt(var + LN_EPS) * gamma + beta


def reference_forward(x, y, p):
    """Pure-JAX f32 reference mirroring the PyTorch module (eval mode)."""
    f32 = jnp.float32
    h = (x.astype(f32) @ p["w1a"].astype(f32).T
         + y.astype(f32) @ p["w1b"].astype(f32).T + p["p1"][:, 0])
    h = jnp.maximum(h, 0.0)
    h = _layernorm_rows(h, p["p1"][:, 1], p["p1"][:, 2])
    r = jnp.maximum(h @ p["w2"].astype(f32).T + p["p2"][:, 0], 0.0)
    r = _layernorm_rows(r, p["p2"][:, 1], p["p2"][:, 2])
    h = h + r
    return jax.nn.sigmoid(h @ p["w3"].astype(f32).T + p["b3"][:, 0])


if __name__ == "__main__":
    # Module-consistent small shapes: nb_iprs=16 (concat dim 32), nodes=[32], nb_rels=8.
    NB_IPRS, HIDDEN, NB_RELS = 16, 32, 8
    key = jax.random.PRNGKey(0)
    kp, kx, ky, kx2, ky2 = jax.random.split(key, 5)
    params = init_params(kp, NB_IPRS, HIDDEN, NB_RELS)

    # --- small batch (single tile) ---
    B = 8
    x = jax.random.normal(kx, (B, NB_IPRS), jnp.float32)
    y = jax.random.normal(ky, (B, NB_IPRS), jnp.float32)
    ref = reference_forward(x, y, params)
    out = jax.block_until_ready(dgltn_relation_forward(x, y, params))
    assert out.shape == (B, NB_RELS)
    assert jnp.allclose(out, ref, atol=1e-5, rtol=1e-5), "f32 mismatch (B=8)"

    # --- ragged batch, multi-tile grid (exercises pipelining + megacore split) ---
    B2 = 300
    x2 = jax.random.normal(kx2, (B2, NB_IPRS), jnp.float32)
    y2 = jax.random.normal(ky2, (B2, NB_IPRS), jnp.float32)
    ref2 = reference_forward(x2, y2, params)
    out2 = jax.block_until_ready(dgltn_relation_forward(x2, y2, params))
    assert out2.shape == (B2, NB_RELS)
    assert jnp.allclose(out2, ref2, atol=1e-5, rtol=1e-5), "f32 mismatch (B=300)"

    # --- bf16 matmul-operand path (recommended default on bandwidth-poor v5e) ---
    params_bf16 = cast_matmul_params(params, jnp.bfloat16)
    out_bf16 = jax.block_until_ready(
        dgltn_relation_forward(x2.astype(jnp.bfloat16),
                               y2.astype(jnp.bfloat16), params_bf16))
    assert jnp.allclose(out_bf16, ref2, atol=2e-2), "bf16 mismatch vs reference"

    print("KERNEL_OK")
</pallas_src>

<mosaic_0001>
module attributes {stable_mosaic.version = 11 : i64} {
  func.func @dgltn_kernel(%arg0: i32, %arg1: memref<16x128xf32, #tpu.memory_space<vmem>>, %arg2: memref<16x128xf32, #tpu.memory_space<vmem>>, %arg3: memref<32x16xf32, #tpu.memory_space<vmem>>, %arg4: memref<32x16xf32, #tpu.memory_space<vmem>>, %arg5: memref<32x3xf32, #tpu.memory_space<vmem>>, %arg6: memref<32x32xf32, #tpu.memory_space<vmem>>, %arg7: memref<32x3xf32, #tpu.memory_space<vmem>>, %arg8: memref<8x32xf32, #tpu.memory_space<vmem>>, %arg9: memref<8x1xf32, #tpu.memory_space<vmem>>, %arg10: memref<8x128xf32, #tpu.memory_space<vmem>>) attributes {dimension_semantics = [#tpu.dimension_semantics<parallel>], iteration_bounds = array<i64: 1>, scalar_prefetch = 0 : i64, scratch_operands = 0 : i64, tpu.core_type = #tpu.core_type<tc>, window_params = [{transform_indices = @transform_0, window_bounds = array<i64: 16, 128>}, {transform_indices = @transform_1, window_bounds = array<i64: 16, 128>}, {pipeline_mode = #tpu.pipeline_mode<synchronous>, transform_indices = @transform_2, window_bounds = array<i64: 32, 16>}, {pipeline_mode = #tpu.pipeline_mode<synchronous>, transform_indices = @transform_3, window_bounds = array<i64: 32, 16>}, {pipeline_mode = #tpu.pipeline_mode<synchronous>, transform_indices = @transform_4, window_bounds = array<i64: 32, 3>}, {pipeline_mode = #tpu.pipeline_mode<synchronous>, transform_indices = @transform_5, window_bounds = array<i64: 32, 32>}, {pipeline_mode = #tpu.pipeline_mode<synchronous>, transform_indices = @transform_6, window_bounds = array<i64: 32, 3>}, {pipeline_mode = #tpu.pipeline_mode<synchronous>, transform_indices = @transform_7, window_bounds = array<i64: 8, 32>}, {pipeline_mode = #tpu.pipeline_mode<synchronous>, transform_indices = @transform_8, window_bounds = array<i64: 8, 1>}, {transform_indices = @transform_9, window_bounds = array<i64: 8, 128>}]} {
    %c0 = arith.constant 0 : index
    %c0_0 = arith.constant 0 : index
    %0 = vector.load %arg5[%c0, %c0_0] : memref<32x3xf32, #tpu.memory_space<vmem>>, vector<32x3xf32>
    %c0_1 = arith.constant 0 : index
    %c0_2 = arith.constant 0 : index
    %1 = vector.load %arg7[%c0_1, %c0_2] : memref<32x3xf32, #tpu.memory_space<vmem>>, vector<32x3xf32>
    %c0_3 = arith.constant 0 : index
    %c0_4 = arith.constant 0 : index
    %2 = vector.load %arg3[%c0_3, %c0_4] : memref<32x16xf32, #tpu.memory_space<vmem>>, vector<32x16xf32>
    %c0_5 = arith.constant 0 : index
    %c0_6 = arith.constant 0 : index
    %3 = vector.load %arg1[%c0_5, %c0_6] : memref<16x128xf32, #tpu.memory_space<vmem>>, vector<16x128xf32>
    %cst = arith.constant dense<0.000000e+00> : vector<32x128xf32>
    %4 = tpu.matmul %2, %3, %cst {dimension_numbers = #tpu.dot_dimension_numbers<[1], [0], [0], [1], [0, 0, 1, 1], [], []>} : vector<32x16xf32>, vector<16x128xf32>, vector<32x128xf32> -> vector<32x128xf32>
    %c0_7 = arith.constant 0 : index
    %c0_8 = arith.constant 0 : index
    %5 = vector.load %arg4[%c0_7, %c0_8] : memref<32x16xf32, #tpu.memory_space<vmem>>, vector<32x16xf32>
    %c0_9 = arith.constant 0 : index
    %c0_10 = arith.constant 0 : index
    %6 = vector.load %arg2[%c0_9, %c0_10] : memref<16x128xf32, #tpu.memory_space<vmem>>, vector<16x128xf32>
    %cst_11 = arith.constant dense<0.000000e+00> : vector<32x128xf32>
    %7 = tpu.matmul %5, %6, %cst_11 {dimension_numbers = #tpu.dot_dimension_numbers<[1], [0], [0], [1], [0, 0, 1, 1], [], []>} : vector<32x16xf32>, vector<16x128xf32>, vector<32x128xf32> -> vector<32x128xf32>
    %8 = arith.addf %4, %7 : vector<32x128xf32>
    %9 = vector.extract_strided_slice %0 {offsets = [0, 0], sizes = [32, 1], strides = [1, 1]} : vector<32x3xf32> to vector<32x1xf32>
    %10 = vector.broadcast %9 : vector<32x1xf32> to vector<32x128xf32>
    %11 = arith.addf %8, %10 : vector<32x128xf32>
    %cst_12 = arith.constant 0.000000e+00 : f32
    %12 = vector.broadcast %cst_12 : f32 to vector<32x128xf32>
    %13 = arith.maximumf %11, %12 : vector<32x128xf32>
    %14 = vector.extract_strided_slice %0 {offsets = [0, 1], sizes = [32, 1], strides = [1, 1]} : vector<32x3xf32> to vector<32x1xf32>
    %15 = vector.extract_strided_slice %0 {offsets = [0, 2], sizes = [32, 1], strides = [1, 1]} : vector<32x3xf32> to vector<32x1xf32>
    %cst_13 = arith.constant dense<0.000000e+00> : vector<128xf32>
    %16 = vector.multi_reduction <add>, %13, %cst_13 [0] : vector<32x128xf32> to vector<128xf32>
    %17 = vector.shape_cast %16 : vector<128xf32> to vector<1x128xf32>
    %cst_14 = arith.constant 3.200000e+01 : f32
    %18 = vector.broadcast %cst_14 : f32 to vector<1x128xf32>
    %19 = arith.divf %17, %18 : vector<1x128xf32>
    %20 = vector.broadcast %19 : vector<1x128xf32> to vector<32x128xf32>
    %21 = arith.subf %13, %20 : vector<32x128xf32>
    %22 = arith.mulf %21, %21 : vector<32x128xf32>
    %cst_15 = arith.constant dense<0.000000e+00> : vector<128xf32>
    %23 = vector.multi_reduction <add>, %22, %cst_15 [0] : vector<32x128xf32> to vector<128xf32>
    %24 = vector.shape_cast %23 : vector<128xf32> to vector<1x128xf32>
    %cst_16 = arith.constant 3.200000e+01 : f32
    %25 = vector.broadcast %cst_16 : f32 to vector<1x128xf32>
    %26 = arith.divf %24, %25 : vector<1x128xf32>
    %cst_17 = arith.constant 9.99999974E-6 : f32
    %27 = vector.broadcast %cst_17 : f32 to vector<1x128xf32>
    %28 = arith.addf %26, %27 : vector<1x128xf32>
    %29 = math.rsqrt %28 : vector<1x128xf32>
    %30 = vector.broadcast %29 : vector<1x128xf32> to vector<32x128xf32>
    %31 = arith.mulf %21, %30 : vector<32x128xf32>
    %32 = vector.broadcast %14 : vector<32x1xf32> to vector<32x128xf32>
    %33 = arith.mulf %31, %32 : vector<32x128xf32>
    %34 = vector.broadcast %15 : vector<32x1xf32> to vector<32x128xf32>
    %35 = arith.addf %33, %34 : vector<32x128xf32>
    %c0_18 = arith.constant 0 : index
    %c0_19 = arith.constant 0 : index
    %36 = vector.load %arg6[%c0_18, %c0_19] : memref<32x32xf32, #tpu.memory_space<vmem>>, vector<32x32xf32>
    %cst_20 = arith.constant dense<0.000000e+00> : vector<32x128xf32>
    %37 = tpu.matmul %36, %35, %cst_20 {dimension_numbers = #tpu.dot_dimension_numbers<[1], [0], [0], [1], [0, 0, 1, 1], [], []>} : vector<32x32xf32>, vector<32x128xf32>, vector<32x128xf32> -> vector<32x128xf32>
    %38 = vector.extract_strided_slice %1 {offsets = [0, 0], sizes = [32, 1], strides = [1, 1]} : vector<32x3xf32> to vector<32x1xf32>
    %39 = vector.broadcast %38 : vector<32x1xf32> to vector<32x128xf32>
    %40 = arith.addf %37, %39 : vector<32x128xf32>
    %cst_21 = arith.constant 0.000000e+00 : f32
    %41 = vector.broadcast %cst_21 : f32 to vector<32x128xf32>
    %42 = arith.maximumf %40, %41 : vector<32x128xf32>
    %43 = vector.extract_strided_slice %1 {offsets = [0, 1], sizes = [32, 1], strides = [1, 1]} : vector<32x3xf32> to vector<32x1xf32>
    %44 = vector.extract_strided_slice %1 {offsets = [0, 2], sizes = [32, 1], strides = [1, 1]} : vector<32x3xf32> to vector<32x1xf32>
    %cst_22 = arith.constant dense<0.000000e+00> : vector<128xf32>
    %45 = vector.multi_reduction <add>, %42, %cst_22 [0] : vector<32x128xf32> to vector<128xf32>
    %46 = vector.shape_cast %45 : vector<128xf32> to vector<1x128xf32>
    %cst_23 = arith.constant 3.200000e+01 : f32
    %47 = vector.broadcast %cst_23 : f32 to vector<1x128xf32>
    %48 = arith.divf %46, %47 : vector<1x128xf32>
    %49 = vector.broadcast %48 : vector<1x128xf32> to vector<32x128xf32>
    %50 = arith.subf %42, %49 : vector<32x128xf32>
    %51 = arith.mulf %50, %50 : vector<32x128xf32>
    %cst_24 = arith.constant dense<0.000000e+00> : vector<128xf32>
    %52 = vector.multi_reduction <add>, %51, %cst_24 [0] : vector<32x128xf32> to vector<128xf32>
    %53 = vector.shape_cast %52 : vector<128xf32> to vector<1x128xf32>
    %cst_25 = arith.constant 3.200000e+01 : f32
    %54 = vector.broadcast %cst_25 : f32 to vector<1x128xf32>
    %55 = arith.divf %53, %54 : vector<1x128xf32>
    %cst_26 = arith.constant 9.99999974E-6 : f32
    %56 = vector.broadcast %cst_26 : f32 to vector<1x128xf32>
    %57 = arith.addf %55, %56 : vector<1x128xf32>
    %58 = math.rsqrt %57 : vector<1x128xf32>
    %59 = vector.broadcast %58 : vector<1x128xf32> to vector<32x128xf32>
    %60 = arith.mulf %50, %59 : vector<32x128xf32>
    %61 = vector.broadcast %43 : vector<32x1xf32> to vector<32x128xf32>
    %62 = arith.mulf %60, %61 : vector<32x128xf32>
    %63 = vector.broadcast %44 : vector<32x1xf32> to vector<32x128xf32>
    %64 = arith.addf %62, %63 : vector<32x128xf32>
    %65 = arith.addf %35, %64 : vector<32x128xf32>
    %c0_27 = arith.constant 0 : index
    %c0_28 = arith.constant 0 : index
    %66 = vector.load %arg8[%c0_27, %c0_28] : memref<8x32xf32, #tpu.memory_space<vmem>>, vector<8x32xf32>
    %cst_29 = arith.constant dense<0.000000e+00> : vector<8x128xf32>
    %67 = tpu.matmul %66, %65, %cst_29 {dimension_numbers = #tpu.dot_dimension_numbers<[1], [0], [0], [1], [0, 0, 1, 1], [], []>} : vector<8x32xf32>, vector<32x128xf32>, vector<8x128xf32> -> vector<8x128xf32>
    %c0_30 = arith.constant 0 : index
    %c0_31 = arith.constant 0 : index
    %68 = vector.load %arg9[%c0_30, %c0_31] : memref<8x1xf32, #tpu.memory_space<vmem>>, vector<8x1xf32>
    %69 = vector.broadcast %68 : vector<8x1xf32> to vector<8x128xf32>
    %70 = arith.addf %67, %69 : vector<8x128xf32>
    %71 = arith.negf %70 : vector<8x128xf32>
    %72 = math.exp %71 : vector<8x128xf32>
    %cst_32 = arith.constant 1.000000e+00 : f32
    %73 = vector.broadcast %cst_32 : f32 to vector<8x128xf32>
    %74 = arith.addf %73, %72 : vector<8x128xf32>
    %75 = arith.divf %73, %74 : vector<8x128xf32>
    %c0_33 = arith.constant 0 : index
    %c0_34 = arith.constant 0 : index
    %76 = vector.load %arg10[%c0_33, %c0_34] : memref<8x128xf32, #tpu.memory_space<vmem>>, vector<8x128xf32>
    tpu.vector_store %arg10[%c0_33, %c0_34], %75 {strides = array<i32>} : memref<8x128xf32, #tpu.memory_space<vmem>>, vector<8x128xf32>,
    return
  }
  func.func @transform_0(%arg0: i32) -> (i32, i32) {
    %c0_i32 = arith.constant 0 : i32
    %c0_i32_0 = arith.constant 0 : i32
    return %c0_i32, %arg0 : i32, i32
  }
  func.func @transform_1(%arg0: i32) -> (i32, i32) {
    %c0_i32 = arith.constant 0 : i32
    %c0_i32_0 = arith.constant 0 : i32
    return %c0_i32, %arg0 : i32, i32
  }
  func.func @transform_2(%arg0: i32) -> (i32, i32) {
    %c0_i32 = arith.constant 0 : i32
    %c0_i32_0 = arith.constant 0 : i32
    %c0_i32_1 = arith.constant 0 : i32
    return %c0_i32, %c0_i32_0 : i32, i32
  }
  func.func @transform_3(%arg0: i32) -> (i32, i32) {
    %c0_i32 = arith.constant 0 : i32
    %c0_i32_0 = arith.constant 0 : i32
    %c0_i32_1 = arith.constant 0 : i32
    return %c0_i32, %c0_i32_0 : i32, i32
  }
  func.func @transform_4(%arg0: i32) -> (i32, i32) {
    %c0_i32 = arith.constant 0 : i32
    %c0_i32_0 = arith.constant 0 : i32
    %c0_i32_1 = arith.constant 0 : i32
    return %c0_i32, %c0_i32_0 : i32, i32
  }
  func.func @transform_5(%arg0: i32) -> (i32, i32) {
    %c0_i32 = arith.constant 0 : i32
    %c0_i32_0 = arith.constant 0 : i32
    %c0_i32_1 = arith.constant 0 : i32
    return %c0_i32, %c0_i32_0 : i32, i32
  }
  func.func @transform_6(%arg0: i32) -> (i32, i32) {
    %c0_i32 = arith.constant 0 : i32
    %c0_i32_0 = arith.constant 0 : i32
    %c0_i32_1 = arith.constant 0 : i32
    return %c0_i32, %c0_i32_0 : i32, i32
  }
  func.func @transform_7(%arg0: i32) -> (i32, i32) {
    %c0_i32 = arith.constant 0 : i32
    %c0_i32_0 = arith.constant 0 : i32
    %c0_i32_1 = arith.constant 0 : i32
    return %c0_i32, %c0_i32_0 : i32, i32
  }
  func.func @transform_8(%arg0: i32) -> (i32, i32) {
    %c0_i32 = arith.constant 0 : i32
    %c0_i32_0 = arith.constant 0 : i32
    %c0_i32_1 = arith.constant 0 : i32
    return %c0_i32, %c0_i32_0 : i32, i32
  }
  func.func @transform_9(%arg0: i32) -> (i32, i32) {
    %c0_i32 = arith.constant 0 : i32
    %c0_i32_0 = arith.constant 0 : i32
    return %c0_i32, %arg0 : i32, i32
  }
}

</mosaic_0001>

<llo_original>
// kernel: tpu_custom_call.1
$region0: #{tpu_custom_call.1}
  #allocation0 [shape = 'u32[]', space=smem, size = 0x4, offset = 0x4, fixed_abs, tag = 'smem constant byte address 0x4 - core index']
  #allocation1 [shape = 'u32[144,128]{1,0:T(1,128)}', space=vmem, size = 0x12000, scoped, tag = 'internal scratch']
  %s0 = inlined_call_operand.vmem [shape: f32[16,128], index: 0, kind: input, shape index: {}]
  %s1 = inlined_call_operand.vmem [shape: f32[16,128], index: 1, kind: input, shape index: {}]
  %s2 = inlined_call_operand.vmem [shape: f32[32,16], index: 2, kind: input, shape index: {}]
  %s3 = inlined_call_operand.vmem [shape: f32[32,16], index: 3, kind: input, shape index: {}]
  %s4 = inlined_call_operand.vmem [shape: f32[32,3], index: 4, kind: input, shape index: {}]
  %s5 = inlined_call_operand.vmem [shape: f32[32,32], index: 5, kind: input, shape index: {}]
  %s6 = inlined_call_operand.vmem [shape: f32[32,3], index: 6, kind: input, shape index: {}]
  %s7 = inlined_call_operand.vmem [shape: f32[8,32], index: 7, kind: input, shape index: {}]
  %s8 = inlined_call_operand.vmem [shape: f32[8,1], index: 8, kind: input, shape index: {}]
  %s9 = inlined_call_operand.hbm [shape: f32[8,128], index: 9, kind: output, shape index: {}]
  %s10 = sld [smem:[#allocation0]]
  $region46: #{tpu_custom_call.1} parent=0
    _
  %s12 = ssub.s32 1, %s10
  %s13 = scalar_select 0, %s12, %s10
  $region1: #{tpu_custom_call.1} parent=0
    #allocation2 [shape = 'u8[4096]{0}', space=vmem, size = 0x1000, scoped, tag = 'output window, operand 0, single buffered']
    #allocation3 [shape = 's32[1]{0}', space=sflag, size = 0x4, scoped, tag = 'scoped memory for tpu_custom_call.1']
    %14 = vsyncpa [#allocation3], 0
    // Predicated region
    $region2: #{tpu_custom_call.1} parent=1 // pred_check
      _
    $region3: #{tpu_custom_call.1} parent=1 // pred_check_branch
      %16 = sbr.rel (0) target = $region5
    $region4: #{tpu_custom_call.1} parent=1 // pred_region
      _
    $region5: #{tpu_custom_call.1} parent=1 // pred_fallthru
      _
    // Predicated region
    $region6: #{tpu_custom_call.1} parent=1 // pred_check
      _
    $region7: #{tpu_custom_call.1} parent=1 // pred_check_branch
      %18 = sbr.rel (0) target = $region9
    $region8: #{tpu_custom_call.1} parent=1 // pred_region
      _
    $region9: #{tpu_custom_call.1} parent=1 // pred_fallthru
      _
    // Predicated region
    $region10: #{tpu_custom_call.1} parent=1 // pred_check
      _
    $region11: #{tpu_custom_call.1} parent=1 // pred_check_branch
      %20 = sbr.rel (0) target = $region13
    $region12: #{tpu_custom_call.1} parent=1 // pred_region
      _
    $region13: #{tpu_custom_call.1} parent=1 // pred_fallthru
      _
    // Predicated region
    $region14: #{tpu_custom_call.1} parent=1 // pred_check
      _
    $region15: #{tpu_custom_call.1} parent=1 // pred_check_branch
      %22 = sbr.rel (0) target = $region17
    $region16: #{tpu_custom_call.1} parent=1 // pred_region
      _
    $region17: #{tpu_custom_call.1} parent=1 // pred_fallthru
      _
    // Predicated region
    $region18: #{tpu_custom_call.1} parent=1 // pred_check
      _
    $region19: #{tpu_custom_call.1} parent=1 // pred_check_branch
      %24 = sbr.rel (0) target = $region21
    $region20: #{tpu_custom_call.1} parent=1 // pred_region
      _
    $region21: #{tpu_custom_call.1} parent=1 // pred_fallthru
      _
    // Predicated region
    $region22: #{tpu_custom_call.1} parent=1 // pred_check
      _
    $region23: #{tpu_custom_call.1} parent=1 // pred_check_branch
      %26 = sbr.rel (0) target = $region25
    $region24: #{tpu_custom_call.1} parent=1 // pred_region
      _
    $region25: #{tpu_custom_call.1} parent=1 // pred_fallthru
      _
    // Predicated region
    $region26: #{tpu_custom_call.1} parent=1 // pred_check
      _
    $region27: #{tpu_custom_call.1} parent=1 // pred_check_branch
      %28 = sbr.rel (0) target = $region29
    $region28: #{tpu_custom_call.1} parent=1 // pred_region
      _
    $region29: #{tpu_custom_call.1} parent=1 // pred_fallthru
      _
    // Predicated region
    $region30: #{tpu_custom_call.1} parent=1 // pred_check
      _
    $region31: #{tpu_custom_call.1} parent=1 // pred_check_branch
      %30 = sbr.rel (0) target = $region33
    $region32: #{tpu_custom_call.1} parent=1 // pred_region
      _
    $region33: #{tpu_custom_call.1} parent=1 // pred_fallthru
      _
    // Predicated region
    $region34: #{tpu_custom_call.1} parent=1 // pred_check
      _
    $region35: #{tpu_custom_call.1} parent=1 // pred_check_branch
      %32 = sbr.rel (0) target = $region37
    $region36: #{tpu_custom_call.1} parent=1 // pred_region
      _
    $region37: #{tpu_custom_call.1} parent=1 // pred_fallthru
      _
    %v33 = vld [vmem:[%s4] sm:$0xff]
    %v34 = vld [vmem:[%s4 + $0x8] sm:$0xff]
    %v35 = vld [vmem:[%s4 + $0x10] sm:$0xff]
    %v36 = vld [vmem:[%s4 + $0x18] sm:$0xff]
    %v37 = vld [vmem:[%s6] sm:$0xff]
    %v38 = vld [vmem:[%s6 + $0x8] sm:$0xff]
    %v39 = vld [vmem:[%s6 + $0x10] sm:$0xff]
    %v40 = vld [vmem:[%s6 + $0x18] sm:$0xff]
    %v41 = vld [vmem:[%s2] sm:$0xff]
    %v42 = vld [vmem:[%s2 + $0x8] sm:$0xff]
    %v43 = vld [vmem:[%s2 + $0x10] sm:$0xff]
    %v44 = vld [vmem:[%s2 + $0x18] sm:$0xff]
    %v45 = vld [vmem:[%s0] sm:$0xff]
    %v46 = vld [vmem:[%s0 + $0x8] sm:$0xff]
    %v47 = vld [vmem:[%s3] sm:$0xff]
    %v48 = vld [vmem:[%s3 + $0x8] sm:$0xff]
    %v49 = vld [vmem:[%s3 + $0x10] sm:$0xff]
    %v50 = vld [vmem:[%s3 + $0x18] sm:$0xff]
    %v51 = vld [vmem:[%s1] sm:$0xff]
    %v52 = vld [vmem:[%s1 + $0x8] sm:$0xff]
    %vm53 = vcmask 130048
    %v55 = vsel %vm53, %v47, 0
    %v58 = vsel %vm53, %v48, 0
    %v61 = vsel %vm53, %v49, 0
    %v64 = vsel %vm53, %v50, 0
    %66 = vmatprep.subr.mxu0 0.0
    %67 = vmatpush1.msra.mxu0 0.0
    %68 = vmatprep.subr.mxu0 0.0
    %69 = vmatpush1.msra.mxu0 0.0
    %70 = vmatprep.subr.mxu0 0.0
    %71 = vmatpush1.msra.mxu0 0.0
    %72 = vmatprep.subr.mxu0 0.0
    %73 = vmatpush1.msra.mxu0 0.0
    %74 = vmatprep.subr.mxu0 0.0
    %75 = vmatpush1.msra.mxu0 0.0
    %76 = vmatprep.subr.mxu0 0.0
    %77 = vmatpush1.msra.mxu0 0.0
    %78 = vmatprep.subr.mxu0 0.0
    %79 = vmatpush1.msra.mxu0 0.0
    %80 = vmatprep.subr.mxu0 0.0
    %81 = vmatpush1.msra.mxu0 0.0
    %82 = vmatprep.subr.mxu0 0.0
    %83 = vmatpush1.msra.mxu0 0.0
    %84 = vmatprep.subr.mxu0 0.0
    %85 = vmatpush1.msra.mxu0 0.0
    %86 = vmatprep.subr.mxu0 0.0
    %87 = vmatpush1.msra.mxu0 0.0
    %88 = vmatprep.subr.mxu0 0.0
    %89 = vmatpush1.msra.mxu0 0.0
    %90 = vmatprep.subr.mxu0 0.0
    %91 = vmatpush1.msra.mxu0 0.0
    %92 = vmatprep.subr.mxu0 0.0
    %93 = vmatpush1.msra.mxu0 0.0
    %94 = vmatprep.subr.mxu0 0.0
    %95 = vmatpush1.msra.mxu0 %v52
    %96 = vmatprep.subr.mxu0 0.0
    %97 = vmatpush1.msra.mxu0 %v51
    %98 = vmatprep.subr.mxu0 0.0
    %99 = vmatpush2.msra.mxu0 0.0
    %100 = vmatprep.subr.mxu0 0.0
    %101 = vmatpush2.msra.mxu0 0.0
    %102 = vmatprep.subr.mxu0 0.0
    %103 = vmatpush2.msra.mxu0 0.0
    %104 = vmatprep.subr.mxu0 0.0
    %105 = vmatpush2.msra.mxu0 0.0
    %106 = vmatprep.subr.mxu0 0.0
    %107 = vmatpush2.msra.mxu0 0.0
    %108 = vmatprep.subr.mxu0 0.0
    %109 = vmatpush2.msra.mxu0 0.0
    %110 = vmatprep.subr.mxu0 0.0
    %111 = vmatpush2.msra.mxu0 0.0
    %112 = vmatprep.subr.mxu0 0.0
    %113 = vmatpush2.msra.mxu0 0.0
    %114 = vmatprep.subr.mxu0 0.0
    %115 = vmatpush2.msra.mxu0 0.0
    %116 = vmatprep.subr.mxu0 0.0
    %117 = vmatpush2.msra.mxu0 0.0
    %118 = vmatprep.subr.mxu0 0.0
    %119 = vmatpush2.msra.mxu0 0.0
    %120 = vmatprep.subr.mxu0 0.0
    %121 = vmatpush2.msra.mxu0 0.0
    %122 = vmatprep.subr.mxu0 0.0
    %123 = vmatpush2.msra.mxu0 0.0
    %124 = vmatprep.subr.mxu0 0.0
    %125 = vmatpush2.msra.mxu0 0.0
    %126 = vmatprep.subr.mxu0 0.0
    %127 = vmatpush2.msra.mxu0 0.0
    %128 = vmatprep.subr.mxu0 0.0
    %129 = vmatpush2.msra.mxu0 0.0
    %130 = vmatprep.mubr.f32.mxu0 0.0
    %131 = vmatmul.mubr.f32.gmra.mxu0 %v55
    %v132 = vpop.f32.mrf.mxu0
    %v133 = vadd.f32 0.0, %v132
    %v134 = vpop.f32.mrf.mxu0
    %135 = vmatprep.mubr.f32.mxu0 0.0
    %136 = vmatmul.mubr.f32.gmra.mxu0 %v58
    %v137 = vpop.f32.mrf.mxu0
    %v138 = vadd.f32 0.0, %v137
    %v139 = vpop.f32.mrf.mxu0
    %140 = vmatprep.mubr.f32.mxu0 0.0
    %141 = vmatmul.mubr.f32.gmra.mxu0 %v61
    %v142 = vpop.f32.mrf.mxu0
    %v143 = vadd.f32 0.0, %v142
    %v144 = vpop.f32.mrf.mxu0
    %145 = vmatprep.mubr.f32.mxu0 0.0
    %146 = vmatmul.mubr.f32.gmra.mxu0 %v64
    %v147 = vpop.f32.mrf.mxu0
    %v148 = vadd.f32 0.0, %v147
    %v149 = vpop.f32.mrf.mxu0
    %150 = vdwg.mxu0
    %v152 = vsel %vm53, %v41, 0
    %v155 = vsel %vm53, %v42, 0
    %v158 = vsel %vm53, %v43, 0
    %v161 = vsel %vm53, %v44, 0
    %163 = vmatprep.subr.mxu0 0.0
    %164 = vmatpush1.msra.mxu0 0.0
    %165 = vmatprep.subr.mxu0 0.0
    %166 = vmatpush1.msra.mxu0 0.0
    %167 = vmatprep.subr.mxu0 0.0
    %168 = vmatpush1.msra.mxu0 0.0
    %169 = vmatprep.subr.mxu0 0.0
    %170 = vmatpush1.msra.mxu0 0.0
    %171 = vmatprep.subr.mxu0 0.0
    %172 = vmatpush1.msra.mxu0 0.0
    %173 = vmatprep.subr.mxu0 0.0
    %174 = vmatpush1.msra.mxu0 0.0
    %175 = vmatprep.subr.mxu0 0.0
    %176 = vmatpush1.msra.mxu0 0.0
    %177 = vmatprep.subr.mxu0 0.0
    %178 = vmatpush1.msra.mxu0 0.0
    %179 = vmatprep.subr.mxu0 0.0
    %180 = vmatpush1.msra.mxu0 0.0
    %181 = vmatprep.subr.mxu0 0.0
    %182 = vmatpush1.msra.mxu0 0.0
    %183 = vmatprep.subr.mxu0 0.0
    %184 = vmatpush1.msra.mxu0 0.0
    %185 = vmatprep.subr.mxu0 0.0
    %186 = vmatpush1.msra.mxu0 0.0
    %187 = vmatprep.subr.mxu0 0.0
    %188 = vmatpush1.msra.mxu0 0.0
    %189 = vmatprep.subr.mxu0 0.0
    %190 = vmatpush1.msra.mxu0 0.0
    %191 = vmatprep.subr.mxu0 0.0
    %192 = vmatpush1.msra.mxu0 %v46
    %193 = vmatprep.subr.mxu0 0.0
    %194 = vmatpush1.msra.mxu0 %v45
    %195 = vmatprep.subr.mxu0 0.0
    %196 = vmatpush2.msra.mxu0 0.0
    %197 = vmatprep.subr.mxu0 0.0
    %198 = vmatpush2.msra.mxu0 0.0
    %199 = vmatprep.subr.mxu0 0.0
    %200 = vmatpush2.msra.mxu0 0.0
    %201 = vmatprep.subr.mxu0 0.0
    %202 = vmatpush2.msra.mxu0 0.0
    %203 = vmatprep.subr.mxu0 0.0
    %204 = vmatpush2.msra.mxu0 0.0
    %205 = vmatprep.subr.mxu0 0.0
    %206 = vmatpush2.msra.mxu0 0.0
    %207 = vmatprep.subr.mxu0 0.0
    %208 = vmatpush2.msra.mxu0 0.0
    %209 = vmatprep.subr.mxu0 0.0
    %210 = vmatpush2.msra.mxu0 0.0
    %211 = vmatprep.subr.mxu0 0.0
    %212 = vmatpush2.msra.mxu0 0.0
    %213 = vmatprep.subr.mxu0 0.0
    %214 = vmatpush2.msra.mxu0 0.0
    %215 = vmatprep.subr.mxu0 0.0
    %216 = vmatpush2.msra.mxu0 0.0
    %217 = vmatprep.subr.mxu0 0.0
    %218 = vmatpush2.msra.mxu0 0.0
    %219 = vmatprep.subr.mxu0 0.0
    %220 = vmatpush2.msra.mxu0 0.0
    %221 = vmatprep.subr.mxu0 0.0
    %222 = vmatpush2.msra.mxu0 0.0
    %223 = vmatprep.subr.mxu0 0.0
    %224 = vmatpush2.msra.mxu0 0.0
    %225 = vmatprep.subr.mxu0 0.0
    %226 = vmatpush2.msra.mxu0 0.0
    %227 = vmatprep.mubr.f32.mxu0 0.0
    %228 = vmatmul.mubr.f32.gmra.mxu0 %v152
    %v229 = vpop.f32.mrf.mxu0
    %v230 = vadd.f32 %v133, %v229
    %v231 = vpop.f32.mrf.mxu0
    %232 = vmatprep.mubr.f32.mxu0 0.0
    %233 = vmatmul.mubr.f32.gmra.mxu0 %v155
    %v234 = vpop.f32.mrf.mxu0
    %v235 = vadd.f32 %v138, %v234
    %v236 = vpop.f32.mrf.mxu0
    %237 = vmatprep.mubr.f32.mxu0 0.0
    %238 = vmatmul.mubr.f32.gmra.mxu0 %v158
    %v239 = vpop.f32.mrf.mxu0
    %v240 = vadd.f32 %v143, %v239
    %v241 = vpop.f32.mrf.mxu0
    %242 = vmatprep.mubr.f32.mxu0 0.0
    %243 = vmatmul.mubr.f32.gmra.mxu0 %v161
    %v244 = vpop.f32.mrf.mxu0
    %v245 = vadd.f32 %v148, %v244
    %v246 = vpop.f32.mrf.mxu0
    %247 = vdwg.mxu0
    %249 = vset.pattern.permute.xlu0 0
    %250 = vperm.xlu0 %249, %v33
    %v251 = vpop.permute.xlu0 %250
    %254 = vset.pattern.permute.xlu0 0
    %255 = vperm.xlu0 %254, %v34
    %v256 = vpop.permute.xlu0 %255
    %259 = vset.pattern.permute.xlu0 0
    %260 = vperm.xlu0 %259, %v35
    %v261 = vpop.permute.xlu0 %260
    %264 = vset.pattern.permute.xlu0 0
    %265 = vperm.xlu0 %264, %v36
    %v266 = vpop.permute.xlu0 %265
    %v268 = vadd.f32 %v230, %v251
    %v269 = vadd.f32 %v235, %v256
    %v270 = vadd.f32 %v240, %v261
    %v271 = vadd.f32 %v245, %v266
    %v272 = vmax.f32 %v268, 0.0
    %v273 = vmax.f32 %v269, 0.0
    %v274 = vmax.f32 %v270, 0.0
    %v275 = vmax.f32 %v271, 0.0
    %v276 = vadd.f32 %v272, %v273
    %v277 = vadd.f32 %v276, %v274
    %v278 = vadd.f32 %v277, %v275
    %v279 = vrot.slane %v278, 4
    %v280 = vadd.f32 %v278, %v279
    %v281 = vrot.slane %v280, 2
    %v282 = vadd.f32 %v280, %v281
    %v283 = vrot.slane %v282, 1
    %v284 = vadd.f32 %v282, %v283
    %v285 = vrcp.pop 32.0
    %v286 = vmul.f32 %v284, %v285
    %v287 = vsub.f32 %v272, %v286
    %v288 = vsub.f32 %v273, %v286
    %v289 = vsub.f32 %v274, %v286
    %v290 = vsub.f32 %v275, %v286
    %v291 = vmul.f32 %v287, %v287
    %v292 = vmul.f32 %v288, %v288
    %v293 = vmul.f32 %v289, %v289
    %v294 = vmul.f32 %v290, %v290
    %v295 = vadd.f32 %v291, %v292
    %v296 = vadd.f32 %v295, %v293
    %v297 = vadd.f32 %v296, %v294
    %v298 = vrot.slane %v297, 4
    %v299 = vadd.f32 %v297, %v298
    %v300 = vrot.slane %v299, 2
    %v301 = vadd.f32 %v299, %v300
    %v302 = vrot.slane %v301, 1
    %v303 = vadd.f32 %v301, %v302
    %v304 = vmul.f32 %v303, %v285
    %v305 = vadd.f32 %v304, 1e-05
    %v306 = vrsqrt.pop %v305
    %v307 = vmul.f32 %v287, %v306
    %v308 = vmul.f32 %v288, %v306
    %v309 = vmul.f32 %v289, %v306
    %v310 = vmul.f32 %v290, %v306
    %311 = vset.pattern.permute.xlu0 1
    %312 = vperm.xlu0 %311, %v33
    %v313 = vpop.permute.xlu0 %312
    %315 = vset.pattern.permute.xlu0 1
    %316 = vperm.xlu0 %315, %v34
    %v317 = vpop.permute.xlu0 %316
    %319 = vset.pattern.permute.xlu0 1
    %320 = vperm.xlu0 %319, %v35
    %v321 = vpop.permute.xlu0 %320
    %323 = vset.pattern.permute.xlu0 1
    %324 = vperm.xlu0 %323, %v36
    %v325 = vpop.permute.xlu0 %324
    %v327 = vmul.f32 %v307, %v313
    %v328 = vmul.f32 %v308, %v317
    %v329 = vmul.f32 %v309, %v321
    %v330 = vmul.f32 %v310, %v325
    %331 = vset.pattern.permute.xlu0 2
    %332 = vperm.xlu0 %331, %v33
    %v333 = vpop.permute.xlu0 %332
    %335 = vset.pattern.permute.xlu0 2
    %336 = vperm.xlu0 %335, %v34
    %v337 = vpop.permute.xlu0 %336
    %339 = vset.pattern.permute.xlu0 2
    %340 = vperm.xlu0 %339, %v35
    %v341 = vpop.permute.xlu0 %340
    %343 = vset.pattern.permute.xlu0 2
    %344 = vperm.xlu0 %343, %v36
    %v345 = vpop.permute.xlu0 %344
    %v347 = vadd.f32 %v327, %v333
    %v348 = vadd.f32 %v328, %v337
    %v349 = vadd.f32 %v329, %v341
    %v350 = vadd.f32 %v330, %v345
    %v351 = vld [vmem:[%s5] sm:$0xff]
    %v352 = vld [vmem:[%s5 + $0x8] sm:$0xff]
    %v353 = vld [vmem:[%s5 + $0x10] sm:$0xff]
    %v354 = vld [vmem:[%s5 + $0x18] sm:$0xff]
    %356 = vset.pattern.permute.xlu0 0
    %357 = vperm.xlu0 %356, %v37
    %v358 = vpop.permute.xlu0 %357
    %361 = vset.pattern.permute.xlu0 0
    %362 = vperm.xlu0 %361, %v38
    %v363 = vpop.permute.xlu0 %362
    %366 = vset.pattern.permute.xlu0 0
    %367 = vperm.xlu0 %366, %v39
    %v368 = vpop.permute.xlu0 %367
    %371 = vset.pattern.permute.xlu0 0
    %372 = vperm.xlu0 %371, %v40
    %v373 = vpop.permute.xlu0 %372
    %vm375 = vcmask 261120
    %v377 = vsel %vm375, %v351, 0
    %v380 = vsel %vm375, %v352, 0
    %v383 = vsel %vm375, %v353, 0
    %v386 = vsel %vm375, %v354, 0
    %388 = vmatprep.subr.mxu0 0.0
    %389 = vmatpush1.msra.mxu0 0.0
    %390 = vmatprep.subr.mxu0 0.0
    %391 = vmatpush1.msra.mxu0 0.0
    %392 = vmatprep.subr.mxu0 0.0
    %393 = vmatpush1.msra.mxu0 0.0
    %394 = vmatprep.subr.mxu0 0.0
    %395 = vmatpush1.msra.mxu0 0.0
    %396 = vmatprep.subr.mxu0 0.0
    %397 = vmatpush1.msra.mxu0 0.0
    %398 = vmatprep.subr.mxu0 0.0
    %399 = vmatpush1.msra.mxu0 0.0
    %400 = vmatprep.subr.mxu0 0.0
    %401 = vmatpush1.msra.mxu0 0.0
    %402 = vmatprep.subr.mxu0 0.0
    %403 = vmatpush1.msra.mxu0 0.0
    %404 = vmatprep.subr.mxu0 0.0
    %405 = vmatpush1.msra.mxu0 0.0
    %406 = vmatprep.subr.mxu0 0.0
    %407 = vmatpush1.msra.mxu0 0.0
    %408 = vmatprep.subr.mxu0 0.0
    %409 = vmatpush1.msra.mxu0 0.0
    %410 = vmatprep.subr.mxu0 0.0
    %411 = vmatpush1.msra.mxu0 0.0
    %412 = vmatprep.subr.mxu0 0.0
    %413 = vmatpush1.msra.mxu0 %v350
    %414 = vmatprep.subr.mxu0 0.0
    %415 = vmatpush1.msra.mxu0 %v349
    %416 = vmatprep.subr.mxu0 0.0
    %417 = vmatpush1.msra.mxu0 %v348
    %418 = vmatprep.subr.mxu0 0.0
    %419 = vmatpush1.msra.mxu0 %v347
    %420 = vmatprep.subr.mxu0 0.0
    %421 = vmatpush2.msra.mxu0 0.0
    %422 = vmatprep.subr.mxu0 0.0
    %423 = vmatpush2.msra.mxu0 0.0
    %424 = vmatprep.subr.mxu0 0.0
    %425 = vmatpush2.msra.mxu0 0.0
    %426 = vmatprep.subr.mxu0 0.0
    %427 = vmatpush2.msra.mxu0 0.0
    %428 = vmatprep.subr.mxu0 0.0
    %429 = vmatpush2.msra.mxu0 0.0
    %430 = vmatprep.subr.mxu0 0.0
    %431 = vmatpush2.msra.mxu0 0.0
    %432 = vmatprep.subr.mxu0 0.0
    %433 = vmatpush2.msra.mxu0 0.0
    %434 = vmatprep.subr.mxu0 0.0
    %435 = vmatpush2.msra.mxu0 0.0
    %436 = vmatprep.subr.mxu0 0.0
    %437 = vmatpush2.msra.mxu0 0.0
    %438 = vmatprep.subr.mxu0 0.0
    %439 = vmatpush2.msra.mxu0 0.0
    %440 = vmatprep.subr.mxu0 0.0
    %441 = vmatpush2.msra.mxu0 0.0
    %442 = vmatprep.subr.mxu0 0.0
    %443 = vmatpush2.msra.mxu0 0.0
    %444 = vmatprep.subr.mxu0 0.0
    %445 = vmatpush2.msra.mxu0 0.0
    %446 = vmatprep.subr.mxu0 0.0
    %447 = vmatpush2.msra.mxu0 0.0
    %448 = vmatprep.subr.mxu0 0.0
    %449 = vmatpush2.msra.mxu0 0.0
    %450 = vmatprep.subr.mxu0 0.0
    %451 = vmatpush2.msra.mxu0 0.0
    %452 = vmatprep.mubr.f32.mxu0 0.0
    %453 = vmatmul.mubr.f32.gmra.mxu0 %v377
    %v454 = vpop.f32.mrf.mxu0
    %v455 = vadd.f32 %v358, %v454
    %v456 = vpop.f32.mrf.mxu0
    %457 = vmatprep.mubr.f32.mxu0 0.0
    %458 = vmatmul.mubr.f32.gmra.mxu0 %v380
    %v459 = vpop.f32.mrf.mxu0
    %v460 = vadd.f32 %v363, %v459
    %v461 = vpop.f32.mrf.mxu0
    %462 = vmatprep.mubr.f32.mxu0 0.0
    %463 = vmatmul.mubr.f32.gmra.mxu0 %v383
    %v464 = vpop.f32.mrf.mxu0
    %v465 = vadd.f32 %v368, %v464
    %v466 = vpop.f32.mrf.mxu0
    %467 = vmatprep.mubr.f32.mxu0 0.0
    %468 = vmatmul.mubr.f32.gmra.mxu0 %v386
    %v469 = vpop.f32.mrf.mxu0
    %v470 = vadd.f32 %v373, %v469
    %v471 = vpop.f32.mrf.mxu0
    %472 = vdwg.mxu0
    %v473 = vmax.f32 %v455, 0.0
    %v474 = vmax.f32 %v460, 0.0
    %v475 = vmax.f32 %v465, 0.0
    %v476 = vmax.f32 %v470, 0.0
    %v477 = vadd.f32 %v473, %v474
    %v478 = vadd.f32 %v477, %v475
    %v479 = vadd.f32 %v478, %v476
    %v480 = vrot.slane %v479, 4
    %v481 = vadd.f32 %v479, %v480
    %v482 = vrot.slane %v481, 2
    %v483 = vadd.f32 %v481, %v482
    %v484 = vrot.slane %v483, 1
    %v485 = vadd.f32 %v483, %v484
    %v486 = vmul.f32 %v485, %v285
    %v487 = vsub.f32 %v473, %v486
    %v488 = vsub.f32 %v474, %v486
    %v489 = vsub.f32 %v475, %v486
    %v490 = vsub.f32 %v476, %v486
    %v491 = vmul.f32 %v487, %v487
    %v492 = vmul.f32 %v488, %v488
    %v493 = vmul.f32 %v489, %v489
    %v494 = vmul.f32 %v490, %v490
    %v495 = vadd.f32 %v491, %v492
    %v496 = vadd.f32 %v495, %v493
    %v497 = vadd.f32 %v496, %v494
    %v498 = vrot.slane %v497, 4
    %v499 = vadd.f32 %v497, %v498
    %v500 = vrot.slane %v499, 2
    %v501 = vadd.f32 %v499, %v500
    %v502 = vrot.slane %v501, 1
    %v503 = vadd.f32 %v501, %v502
    %v504 = vmul.f32 %v503, %v285
    %v505 = vadd.f32 %v504, 1e-05
    %v506 = vrsqrt.pop %v505
    %v507 = vmul.f32 %v487, %v506
    %v508 = vmul.f32 %v488, %v506
    %v509 = vmul.f32 %v489, %v506
    %v510 = vmul.f32 %v490, %v506
    %511 = vset.pattern.permute.xlu0 1
    %512 = vperm.xlu0 %511, %v37
    %v513 = vpop.permute.xlu0 %512
    %515 = vset.pattern.permute.xlu0 1
    %516 = vperm.xlu0 %515, %v38
    %v517 = vpop.permute.xlu0 %516
    %519 = vset.pattern.permute.xlu0 1
    %520 = vperm.xlu0 %519, %v39
    %v521 = vpop.permute.xlu0 %520
    %523 = vset.pattern.permute.xlu0 1
    %524 = vperm.xlu0 %523, %v40
    %v525 = vpop.permute.xlu0 %524
    %v527 = vmul.f32 %v507, %v513
    %v528 = vmul.f32 %v508, %v517
    %v529 = vmul.f32 %v509, %v521
    %v530 = vmul.f32 %v510, %v525
    %531 = vset.pattern.permute.xlu0 2
    %532 = vperm.xlu0 %531, %v37
    %v533 = vpop.permute.xlu0 %532
    %535 = vset.pattern.permute.xlu0 2
    %536 = vperm.xlu0 %535, %v38
    %v537 = vpop.permute.xlu0 %536
    %539 = vset.pattern.permute.xlu0 2
    %540 = vperm.xlu0 %539, %v39
    %v541 = vpop.permute.xlu0 %540
    %543 = vset.pattern.permute.xlu0 2
    %544 = vperm.xlu0 %543, %v40
    %v545 = vpop.permute.xlu0 %544
    %v547 = vadd.f32 %v527, %v533
    %v548 = vadd.f32 %v528, %v537
    %v549 = vadd.f32 %v529, %v541
    %v550 = vadd.f32 %v530, %v545
    %v551 = vadd.f32 %v347, %v547
    %v552 = vadd.f32 %v348, %v548
    %v553 = vadd.f32 %v349, %v549
    %v554 = vadd.f32 %v350, %v550
    %v555 = vld [vmem:[%s7] sm:$0xff]
    %v556 = vld [vmem:[%s8] sm:$0xff]
    %558 = vset.pattern.permute.xlu0 0
    %559 = vperm.xlu0 %558, %v556
    %v560 = vpop.permute.xlu0 %559
    %v563 = vsel %vm375, %v555, 0
    %565 = vmatprep.subr.mxu0 0.0
    %566 = vmatpush1.msra.mxu0 0.0
    %567 = vmatprep.subr.mxu0 0.0
    %568 = vmatpush1.msra.mxu0 0.0
    %569 = vmatprep.subr.mxu0 0.0
    %570 = vmatpush1.msra.mxu0 0.0
    %571 = vmatprep.subr.mxu0 0.0
    %572 = vmatpush1.msra.mxu0 0.0
    %573 = vmatprep.subr.mxu0 0.0
    %574 = vmatpush1.msra.mxu0 0.0
    %575 = vmatprep.subr.mxu0 0.0
    %576 = vmatpush1.msra.mxu0 0.0
    %577 = vmatprep.subr.mxu0 0.0
    %578 = vmatpush1.msra.mxu0 0.0
    %579 = vmatprep.subr.mxu0 0.0
    %580 = vmatpush1.msra.mxu0 0.0
    %581 = vmatprep.subr.mxu0 0.0
    %582 = vmatpush1.msra.mxu0 0.0
    %583 = vmatprep.subr.mxu0 0.0
    %584 = vmatpush1.msra.mxu0 0.0
    %585 = vmatprep.subr.mxu0 0.0
    %586 = vmatpush1.msra.mxu0 0.0
    %587 = vmatprep.subr.mxu0 0.0
    %588 = vmatpush1.msra.mxu0 0.0
    %589 = vmatprep.subr.mxu0 0.0
    %590 = vmatpush1.msra.mxu0 %v554
    %591 = vmatprep.subr.mxu0 0.0
    %592 = vmatpush1.msra.mxu0 %v553
    %593 = vmatprep.subr.mxu0 0.0
    %594 = vmatpush1.msra.mxu0 %v552
    %595 = vmatprep.subr.mxu0 0.0
    %596 = vmatpush1.msra.mxu0 %v551
    %597 = vmatprep.subr.mxu0 0.0
    %598 = vmatpush2.msra.mxu0 0.0
    %599 = vmatprep.subr.mxu0 0.0
    %600 = vmatpush2.msra.mxu0 0.0
    %601 = vmatprep.subr.mxu0 0.0
    %602 = vmatpush2.msra.mxu0 0.0
    %603 = vmatprep.subr.mxu0 0.0
    %604 = vmatpush2.msra.mxu0 0.0
    %605 = vmatprep.subr.mxu0 0.0
    %606 = vmatpush2.msra.mxu0 0.0
    %607 = vmatprep.subr.mxu0 0.0
    %608 = vmatpush2.msra.mxu0 0.0
    %609 = vmatprep.subr.mxu0 0.0
    %610 = vmatpush2.msra.mxu0 0.0
    %611 = vmatprep.subr.mxu0 0.0
    %612 = vmatpush2.msra.mxu0 0.0
    %613 = vmatprep.subr.mxu0 0.0
    %614 = vmatpush2.msra.mxu0 0.0
    %615 = vmatprep.subr.mxu0 0.0
    %616 = vmatpush2.msra.mxu0 0.0
    %617 = vmatprep.subr.mxu0 0.0
    %618 = vmatpush2.msra.mxu0 0.0
    %619 = vmatprep.subr.mxu0 0.0
    %620 = vmatpush2.msra.mxu0 0.0
    %621 = vmatprep.subr.mxu0 0.0
    %622 = vmatpush2.msra.mxu0 0.0
    %623 = vmatprep.subr.mxu0 0.0
    %624 = vmatpush2.msra.mxu0 0.0
    %625 = vmatprep.subr.mxu0 0.0
    %626 = vmatpush2.msra.mxu0 0.0
    %627 = vmatprep.subr.mxu0 0.0
    %628 = vmatpush2.msra.mxu0 0.0
    %629 = vmatprep.mubr.f32.mxu0 0.0
    %630 = vmatmul.mubr.f32.gmra.mxu0 %v563
    %v631 = vpop.f32.mrf.mxu0
    %v632 = vadd.f32 %v560, %v631
    %v633 = vpop.f32.mrf.mxu0
    %634 = vdwg.mxu0
    %v635 = vxor.u32 %v632, 2147483648
    %v636 = vmul.f32 %v635, 1.442695
    %v637 = vpow.pop %v636
    %v638 = vadd.f32 %v637, 1.0
    %v639 = vrcp.pop %v638
    %v640 = vmul.f32 1.0, %v639
    %641 = vst [vmem:[#allocation2] sm:$0xff] %v640
    // Predicated region
    $region38: #{tpu_custom_call.1} parent=1 // pred_check
      _
    $region39: #{tpu_custom_call.1} parent=1 // pred_check_branch
      %643 = sbr.rel (0) target = $region41
    $region40: #{tpu_custom_call.1} parent=1 // pred_region
      %s645 = ssub.s32 128, 128
      %646 = vsyncadd [#allocation3], %s645
      %s648 = sshll.u32 [#allocation2], 4
      %s649 = int_to_ptr.vmem [resolvable:$true] %s648
      %651 = dma.vmem_to_hbm [thread:$0]  %s649, 128, %s9, [#allocation3]
    $region41: #{tpu_custom_call.1} parent=1 // pred_fallthru
      _
    // Predicated region
    $region42: #{tpu_custom_call.1} parent=1 // pred_check
      _
    $region43: #{tpu_custom_call.1} parent=1 // pred_check_branch
      %653 = sbr.rel (0) target = $region45
    $region44: #{tpu_custom_call.1} parent=1 // pred_region
      %654 = dma.done [#allocation3], 128
    $region45: #{tpu_custom_call.1} parent=1 // pred_fallthru
      _
    %655 = vsyncpa [#allocation3], 1

</llo_original>
